<compile_context>
chip_gen: v6e
topology: v6e:2x2x1
jax: 0.10.0
libtpu: 0.0.40
codegen_flags: <defaults>
</compile_context>

<pallas_src>
import functools

import jax
import jax.numpy as jnp
from jax import lax
from jax.experimental import pallas as pl
from jax.experimental.pallas import tpu as pltpu


def _round_up(n, m):
    return -(-n // m) * m


# ----------------------------------------------------------------------------
# Packed-parameter slab layout (lane width = 2*P); row starts 8-aligned.
# ----------------------------------------------------------------------------
def _slab_layout(batch, num_vert, in_dim, num_joint, heatmap_size):
    P = heatmap_size ** 2
    T = num_vert + num_joint
    BV = batch * num_vert
    BT = batch * T
    entries = [
        ("wcat1", in_dim, 2 * P),   # [W_xy1^T | W_z1^T]
        ("w2blk", 2 * P, 2 * P),    # blkdiag(W_xy2^T, W_z2^T)
        ("bcat1", 1, 2 * P),        # [b_xy1 | b_z1]
        ("lxy1", BV, BV),           # kron(I_B, L_xy1)
        ("lz1", BV, BV),            # kron(I_B, L_z1)
        ("axy", BT, BV),            # kron(I_B, beta * [[I];[W_hm]] @ L_xy2)
        ("az", BT, BV),             # kron(I_B, [[I];[W_dm]] @ L_z2)
        ("cxy", BT, P),             # fused beta-scaled xy bias
        ("cz", BT, P),              # fused z bias
        ("g3", P, 3),               # soft-argmax grid [wx/half, wy/half, 0]
        ("offs", 1, 3),             # [-1, -1, 0]
        ("e3", 1, 3),               # [0, 0, 1]
    ]
    layout = {}
    row = 0
    for name, nrows, nlanes in entries:
        layout[name] = (row, nrows, nlanes)
        row += _round_up(nrows, 8)
    return layout, _round_up(row, 8)


# ----------------------------------------------------------------------------
# Fused kernel: graph regression (xy & z) -> mesh2pose/concat -> soft heatmap
# ----------------------------------------------------------------------------
def _gbbmr_fused_kernel(slab_ref, x_ref, coord_ref, latent_ref, depth_ref,
                        *, layout, hm_pixels):
    P = hm_pixels

    def ld(name):  # static slice of the packed parameter slab (zero-cost view)
        r0, nrows, nlanes = layout[name]
        return slab_ref[r0:r0 + nrows, 0:nlanes]

    # ---- graph regression, branches lane-stacked: xy = lanes [0,P), z = [P,2P)
    x2d = x_ref[...]                                                     # (B*V, C)
    xp = jnp.dot(x2d, ld("wcat1"), preferred_element_type=jnp.float32)   # (B*V, 2P)
    hxy = jnp.dot(ld("lxy1"), xp, preferred_element_type=jnp.float32)
    hz = jnp.dot(ld("lz1"), xp, preferred_element_type=jnp.float32)
    lane = lax.broadcasted_iota(jnp.int32, xp.shape, 1)
    h1 = jnp.where(lane < P, hxy, hz) + ld("bcat1")
    h1 = jnp.where(h1 >= 0, h1, 0.1 * h1)                                # LeakyReLU(0.1)
    # TODO(synk): Dropout(0.5) is identity in eval mode; training-mode dropout not implemented.

    hp = jnp.dot(h1, ld("w2blk"), preferred_element_type=jnp.float32)    # (B*V, 2P)
    # fused: L2 application + mesh2pose projection + channel concat (+ beta for xy)
    hm_xy = jnp.dot(ld("axy"), hp, preferred_element_type=jnp.float32)[:, :P] + ld("cxy")
    hm_z = jnp.dot(ld("az"), hp, preferred_element_type=jnp.float32)[:, P:] + ld("cz")

    # ---- SoftHeatmap: spatial softmax + soft-argmax + depth reduction ----
    m = jnp.max(hm_xy, axis=-1, keepdims=True)
    e = jnp.exp(hm_xy - m)
    score = e / jnp.sum(e, axis=-1, keepdims=True)                       # (B*T, P)
    depth = score * hm_z
    cz = jnp.sum(depth, axis=-1, keepdims=True)                          # (B*T, 1)

    # coords (x, y, z): soft-argmax on the (otherwise idle) MXU + broadcasts
    coord = (jnp.dot(score, ld("g3"), preferred_element_type=jnp.float32)
             + ld("offs") + cz * ld("e3"))                               # (B*T, 3)

    coord_ref[...] = coord
    latent_ref[...] = score
    depth_ref[...] = depth


# ----------------------------------------------------------------------------
# Parameter init (deterministic, mirrors module __init__ shapes)
# ----------------------------------------------------------------------------
def init_params(key, in_dim, num_vert, num_joint, heatmap_size):
    P = heatmap_size ** 2
    T = num_vert + num_joint
    ks = iter(jax.random.split(key, 8))

    def linear(k, out_f, in_f):
        kw, kb = jax.random.split(k)
        bound = 1.0 / (in_f ** 0.5)
        w = jax.random.uniform(kw, (out_f, in_f), jnp.float32, -bound, bound)
        b = jax.random.uniform(kb, (out_f,), jnp.float32, -bound, bound)
        return w, b

    p = {}
    # GraphConv adjacency params (identity init, as in __init__)
    p["adj_xy1"] = jnp.eye(num_vert, dtype=jnp.float32)
    p["adj_xy2"] = jnp.eye(num_vert, dtype=jnp.float32)
    p["adj_z1"] = jnp.eye(num_vert, dtype=jnp.float32)
    p["adj_z2"] = jnp.eye(num_vert, dtype=jnp.float32)
    # GraphConv fc weights
    p["w_xy1"], p["b_xy1"] = linear(next(ks), P, in_dim)
    p["w_xy2"], p["b_xy2"] = linear(next(ks), P, P)
    p["w_z1"], p["b_z1"] = linear(next(ks), P, in_dim)
    p["w_z2"], p["b_z2"] = linear(next(ks), P, P)
    # mesh2pose linears
    p["w_hm"], p["b_hm"] = linear(next(ks), num_joint, num_vert)
    p["w_dm"], p["b_dm"] = linear(next(ks), num_joint, num_vert)
    # depthwise 1x1 conv weight of SoftHeatmap (one scalar per channel, no bias)
    p["beta"] = jax.random.uniform(next(ks), (T,), jnp.float32, 0.5, 1.5)
    return p


# ----------------------------------------------------------------------------
# One-time parameter preparation: fold / transpose / block-diag / pack slab
# ----------------------------------------------------------------------------
def prepare_params(params, *, batch, in_dim, num_vert, num_joint, heatmap_size):
    B, V, C, J, H = batch, num_vert, in_dim, num_joint, heatmap_size
    P = H * H
    T = V + J
    f32 = jnp.float32

    def lap(A):  # GraphConv.laplacian
        return A / (jnp.sum(A, axis=1, keepdims=True) + 1e-5)

    eye_b = jnp.eye(B, dtype=f32)

    def batch_blk(M):  # kron(I_B, M): fold batch into the row dimension
        return jnp.kron(eye_b, M)

    # layer 1: branch-fused weight/bias, block-diagonal Laplacians
    w_cat1 = jnp.concatenate([params["w_xy1"].T, params["w_z1"].T], axis=1)    # (C, 2P)
    b_cat1 = jnp.concatenate([params["b_xy1"], params["b_z1"]])[None, :]       # (1, 2P)
    l_xy1 = batch_blk(lap(params["adj_xy1"]))
    l_z1 = batch_blk(lap(params["adj_z1"]))

    # layer 2: block-diagonal weight; L2 + mesh2pose + concat + beta fused into A / C
    zpp = jnp.zeros((P, P), f32)
    w2_blk = jnp.concatenate([
        jnp.concatenate([params["w_xy2"].T, zpp], axis=1),
        jnp.concatenate([zpp, params["w_z2"].T], axis=1)], axis=0)             # (2P, 2P)

    s_xy = jnp.concatenate([jnp.eye(V, dtype=f32), params["w_hm"]], axis=0)    # (T, V)
    s_z = jnp.concatenate([jnp.eye(V, dtype=f32), params["w_dm"]], axis=0)
    beta = params["beta"][:, None]                                             # (T, 1)

    bias_hm = jnp.concatenate(
        [jnp.zeros((V, P), f32), jnp.broadcast_to(params["b_hm"][:, None], (J, P))], axis=0)
    bias_dm = jnp.concatenate(
        [jnp.zeros((V, P), f32), jnp.broadcast_to(params["b_dm"][:, None], (J, P))], axis=0)

    a_xy = beta * (s_xy @ lap(params["adj_xy2"]))                              # (T, V)
    a_z = s_z @ lap(params["adj_z2"])
    c_xy = beta * (jnp.sum(s_xy, axis=1, keepdims=True) * params["b_xy2"][None, :] + bias_hm)
    c_z = jnp.sum(s_z, axis=1, keepdims=True) * params["b_z2"][None, :] + bias_dm

    a_xy_blk = batch_blk(a_xy)                 # (B*T, B*V)
    a_z_blk = batch_blk(a_z)
    c_xy_full = jnp.tile(c_xy, (B, 1))         # (B*T, P)
    c_z_full = jnp.tile(c_z, (B, 1))

    # soft-argmax constants (row-major HxW flattening: x = column, y = row)
    half = float(H // 2)
    idx = jnp.arange(P, dtype=jnp.int32)
    wx = (idx % H).astype(f32)
    wy = (idx // H).astype(f32)
    g3 = jnp.stack([wx / half, wy / half, jnp.zeros((P,), f32)], axis=1)       # (P, 3)
    offs = jnp.array([[-1.0, -1.0, 0.0]], f32)
    e3 = jnp.array([[0.0, 0.0, 1.0]], f32)

    pieces = {"wcat1": w_cat1, "w2blk": w2_blk, "bcat1": b_cat1,
              "lxy1": l_xy1, "lz1": l_z1, "axy": a_xy_blk, "az": a_z_blk,
              "cxy": c_xy_full, "cz": c_z_full, "g3": g3, "offs": offs, "e3": e3}
    layout, total_rows = _slab_layout(B, V, C, J, H)
    slab = jnp.zeros((total_rows, 2 * P), f32)
    for name, arr in pieces.items():
        r0, nrows, nlanes = layout[name]
        assert arr.shape == (nrows, nlanes), (name, arr.shape, (nrows, nlanes))
        slab = slab.at[r0:r0 + nrows, 0:nlanes].set(arr.astype(f32))
    return jax.device_put(slab), layout


# ----------------------------------------------------------------------------
# Steady-state forward: reshape(x) + one fused pallas_call, everything in VMEM
# ----------------------------------------------------------------------------
def gbbmr_forward(slab, x, *, layout, num_joint, heatmap_size):
    B, V, C = x.shape
    H = heatmap_size
    P = H * H
    T = V + num_joint
    x2d = x.reshape(B * V, C)

    vmem = pl.BlockSpec(memory_space=pltpu.MemorySpace.VMEM)
    kernel = functools.partial(_gbbmr_fused_kernel, layout=layout, hm_pixels=P)

    coord, latent, depth = pl.pallas_call(
        kernel,
        out_shape=(
            jax.ShapeDtypeStruct((B * T, 3), jnp.float32),
            jax.ShapeDtypeStruct((B * T, P), jnp.float32),
            jax.ShapeDtypeStruct((B * T, P), jnp.float32),
        ),
        in_specs=[vmem, vmem],
        out_specs=(vmem, vmem, vmem),
    )(slab, x2d)

    joint_coord = coord.reshape(B, T, 3)
    latent_heatmaps = latent.reshape(B, T, H, H)   # NCHW
    depth_maps = depth.reshape(B, T, H, H)         # NCHW
    return joint_coord, latent_heatmaps, depth_maps


if __name__ == "__main__":
    B, in_dim, num_vert, num_joint, heatmap_size = 2, 32, 16, 8, 8
    num_total = num_vert + num_joint

    key = jax.random.PRNGKey(0)
    params = init_params(key, in_dim, num_vert, num_joint, heatmap_size)
    slab, layout = prepare_params(params, batch=B, in_dim=in_dim,
                                  num_vert=num_vert, num_joint=num_joint,
                                  heatmap_size=heatmap_size)
    x = jax.random.normal(jax.random.fold_in(key, 999),
                          (B, num_vert, in_dim), jnp.float32)

    fwd = jax.jit(functools.partial(
        gbbmr_forward, layout=layout, num_joint=num_joint,
        heatmap_size=heatmap_size))
    joint_coord, latent_heatmaps, depth_maps = fwd(slab, x)
    jax.block_until_ready((joint_coord, latent_heatmaps, depth_maps))

    assert joint_coord.shape == (B, num_total, 3)
    assert latent_heatmaps.shape == (B, num_total, heatmap_size, heatmap_size)
    assert depth_maps.shape == (B, num_total, heatmap_size, heatmap_size)
    # sanity: spatial softmax rows must sum to ~1
    sums = jnp.sum(latent_heatmaps.reshape(B, num_total, -1), axis=-1)
    assert bool(jnp.allclose(sums, 1.0, atol=1e-3))
    print("KERNEL_OK")
</pallas_src>

<mosaic_0001>
module attributes {stable_mosaic.version = 11 : i64} {
  func.func @_gbbmr_fused_kernel(%arg0: memref<504x128xf32, #tpu.memory_space<vmem>>, %arg1: memref<32x32xf32, #tpu.memory_space<vmem>>, %arg2: memref<48x3xf32, #tpu.memory_space<vmem>>, %arg3: memref<48x64xf32, #tpu.memory_space<vmem>>, %arg4: memref<48x64xf32, #tpu.memory_space<vmem>>) attributes {dimension_semantics = [], scalar_prefetch = 0 : i64, scratch_operands = 0 : i64, tpu.core_type = #tpu.core_type<tc>} {
    %c0 = arith.constant 0 : index
    %c0_0 = arith.constant 0 : index
    %0 = vector.load %arg1[%c0, %c0_0] : memref<32x32xf32, #tpu.memory_space<vmem>>, vector<32x32xf32>
    %c0_1 = arith.constant 0 : index
    %c0_2 = arith.constant 0 : index
    %1 = vector.load %arg0[%c0_1, %c0_2] : memref<504x128xf32, #tpu.memory_space<vmem>>, vector<32x128xf32>
    %cst = arith.constant dense<0.000000e+00> : vector<32x128xf32>
    %2 = tpu.matmul %0, %1, %cst {dimension_numbers = #tpu.dot_dimension_numbers<[1], [0], [0], [1], [0, 0, 1, 1], [], []>} : vector<32x32xf32>, vector<32x128xf32>, vector<32x128xf32> -> vector<32x128xf32>
    %c168 = arith.constant 168 : index
    %c0_3 = arith.constant 0 : index
    %3 = vector.load %arg0[%c168, %c0_3] : memref<504x128xf32, #tpu.memory_space<vmem>>, vector<32x32xf32>
    %cst_4 = arith.constant dense<0.000000e+00> : vector<32x128xf32>
    %4 = tpu.matmul %3, %2, %cst_4 {dimension_numbers = #tpu.dot_dimension_numbers<[1], [0], [0], [1], [0, 0, 1, 1], [], []>} : vector<32x32xf32>, vector<32x128xf32>, vector<32x128xf32> -> vector<32x128xf32>
    %c200 = arith.constant 200 : index
    %c0_5 = arith.constant 0 : index
    %5 = vector.load %arg0[%c200, %c0_5] : memref<504x128xf32, #tpu.memory_space<vmem>>, vector<32x32xf32>
    %cst_6 = arith.constant dense<0.000000e+00> : vector<32x128xf32>
    %6 = tpu.matmul %5, %2, %cst_6 {dimension_numbers = #tpu.dot_dimension_numbers<[1], [0], [0], [1], [0, 0, 1, 1], [], []>} : vector<32x32xf32>, vector<32x128xf32>, vector<32x128xf32> -> vector<32x128xf32>
    %7 = tpu.iota {dimensions = array<i32: 1>} : vector<32x128xi32>
    %c64_i32 = arith.constant 64 : i32
    %8 = vector.broadcast %c64_i32 : i32 to vector<32x128xi32>
    %9 = arith.cmpi slt, %7, %8 : vector<32x128xi32>
    %10 = arith.select %9, %4, %6 : vector<32x128xi1>, vector<32x128xf32>
    %c160 = arith.constant 160 : index
    %c0_7 = arith.constant 0 : index
    %11 = vector.load %arg0[%c160, %c0_7] : memref<504x128xf32, #tpu.memory_space<vmem>>, vector<1x128xf32>
    %12 = vector.broadcast %11 : vector<1x128xf32> to vector<32x128xf32>
    %13 = arith.addf %10, %12 : vector<32x128xf32>
    %cst_8 = arith.constant 0.000000e+00 : f32
    %14 = vector.broadcast %cst_8 : f32 to vector<32x128xf32>
    %15 = arith.cmpf oge, %13, %14 : vector<32x128xf32>
    %cst_9 = arith.constant 1.000000e-01 : f32
    %16 = vector.broadcast %cst_9 : f32 to vector<32x128xf32>
    %17 = arith.mulf %16, %13 : vector<32x128xf32>
    %18 = arith.select %15, %13, %17 : vector<32x128xi1>, vector<32x128xf32>
    %c32 = arith.constant 32 : index
    %c0_10 = arith.constant 0 : index
    %19 = vector.load %arg0[%c32, %c0_10] : memref<504x128xf32, #tpu.memory_space<vmem>>, vector<128x128xf32>
    %cst_11 = arith.constant dense<0.000000e+00> : vector<32x128xf32>
    %20 = tpu.matmul %18, %19, %cst_11 {dimension_numbers = #tpu.dot_dimension_numbers<[1], [0], [0], [1], [0, 0, 1, 1], [], []>} : vector<32x128xf32>, vector<128x128xf32>, vector<32x128xf32> -> vector<32x128xf32>
    %c232 = arith.constant 232 : index
    %c0_12 = arith.constant 0 : index
    %21 = vector.load %arg0[%c232, %c0_12] : memref<504x128xf32, #tpu.memory_space<vmem>>, vector<48x32xf32>
    %cst_13 = arith.constant dense<0.000000e+00> : vector<48x128xf32>
    %22 = tpu.matmul %21, %20, %cst_13 {dimension_numbers = #tpu.dot_dimension_numbers<[1], [0], [0], [1], [0, 0, 1, 1], [], []>} : vector<48x32xf32>, vector<32x128xf32>, vector<48x128xf32> -> vector<48x128xf32>
    %23 = vector.extract_strided_slice %22 {offsets = [0, 0], sizes = [48, 64], strides = [1, 1]} : vector<48x128xf32> to vector<48x64xf32>
    %c328 = arith.constant 328 : index
    %c0_14 = arith.constant 0 : index
    %24 = vector.load %arg0[%c328, %c0_14] : memref<504x128xf32, #tpu.memory_space<vmem>>, vector<48x64xf32>
    %25 = arith.addf %23, %24 : vector<48x64xf32>
    %c280 = arith.constant 280 : index
    %c0_15 = arith.constant 0 : index
    %26 = vector.load %arg0[%c280, %c0_15] : memref<504x128xf32, #tpu.memory_space<vmem>>, vector<48x32xf32>
    %cst_16 = arith.constant dense<0.000000e+00> : vector<48x128xf32>
    %27 = tpu.matmul %26, %20, %cst_16 {dimension_numbers = #tpu.dot_dimension_numbers<[1], [0], [0], [1], [0, 0, 1, 1], [], []>} : vector<48x32xf32>, vector<32x128xf32>, vector<48x128xf32> -> vector<48x128xf32>
    %28 = vector.extract_strided_slice %27 {offsets = [0, 64], sizes = [48, 64], strides = [1, 1]} : vector<48x128xf32> to vector<48x64xf32>
    %c376 = arith.constant 376 : index
    %c0_17 = arith.constant 0 : index
    %29 = vector.load %arg0[%c376, %c0_17] : memref<504x128xf32, #tpu.memory_space<vmem>>, vector<48x64xf32>
    %30 = arith.addf %28, %29 : vector<48x64xf32>
    %cst_18 = arith.constant dense<0xFF800000> : vector<48xf32>
    %31 = vector.multi_reduction <maximumf>, %25, %cst_18 [1] : vector<48x64xf32> to vector<48xf32>
    %32 = vector.shape_cast %31 : vector<48xf32> to vector<48x1xf32>
    %33 = vector.broadcast %32 : vector<48x1xf32> to vector<48x64xf32>
    %34 = arith.subf %25, %33 : vector<48x64xf32>
    %35 = math.exp %34 : vector<48x64xf32>
    %cst_19 = arith.constant dense<0.000000e+00> : vector<48xf32>
    %36 = vector.multi_reduction <add>, %35, %cst_19 [1] : vector<48x64xf32> to vector<48xf32>
    %37 = vector.shape_cast %36 : vector<48xf32> to vector<48x1xf32>
    %38 = vector.broadcast %37 : vector<48x1xf32> to vector<48x64xf32>
    %39 = arith.divf %35, %38 : vector<48x64xf32>
    %40 = arith.mulf %39, %30 : vector<48x64xf32>
    %cst_20 = arith.constant dense<0.000000e+00> : vector<48xf32>
    %41 = vector.multi_reduction <add>, %40, %cst_20 [1] : vector<48x64xf32> to vector<48xf32>
    %42 = vector.shape_cast %41 : vector<48xf32> to vector<48x1xf32>
    %c424 = arith.constant 424 : index
    %c0_21 = arith.constant 0 : index
    %43 = vector.load %arg0[%c424, %c0_21] : memref<504x128xf32, #tpu.memory_space<vmem>>, vector<64x3xf32>
    %cst_22 = arith.constant dense<0.000000e+00> : vector<48x3xf32>
    %44 = tpu.matmul %39, %43, %cst_22 {dimension_numbers = #tpu.dot_dimension_numbers<[1], [0], [0], [1], [0, 0, 1, 1], [], []>} : vector<48x64xf32>, vector<64x3xf32>, vector<48x3xf32> -> vector<48x3xf32>
    %c488 = arith.constant 488 : index
    %c0_23 = arith.constant 0 : index
    %45 = vector.load %arg0[%c488, %c0_23] : memref<504x128xf32, #tpu.memory_space<vmem>>, vector<1x3xf32>
    %46 = vector.broadcast %45 : vector<1x3xf32> to vector<48x3xf32>
    %47 = arith.addf %44, %46 : vector<48x3xf32>
    %c496 = arith.constant 496 : index
    %c0_24 = arith.constant 0 : index
    %48 = vector.load %arg0[%c496, %c0_24] : memref<504x128xf32, #tpu.memory_space<vmem>>, vector<1x3xf32>
    %49 = vector.broadcast %42 : vector<48x1xf32> to vector<48x3xf32>
    %50 = vector.broadcast %48 : vector<1x3xf32> to vector<48x3xf32>
    %51 = arith.mulf %49, %50 : vector<48x3xf32>
    %52 = arith.addf %47, %51 : vector<48x3xf32>
    %c0_25 = arith.constant 0 : index
    %c0_26 = arith.constant 0 : index
    %53 = vector.load %arg2[%c0_25, %c0_26] : memref<48x3xf32, #tpu.memory_space<vmem>>, vector<48x3xf32>
    tpu.vector_store %arg2[%c0_25, %c0_26], %52 {strides = array<i32>} : memref<48x3xf32, #tpu.memory_space<vmem>>, vector<48x3xf32>,
    %c0_27 = arith.constant 0 : index
    %c0_28 = arith.constant 0 : index
    %54 = vector.load %arg3[%c0_27, %c0_28] : memref<48x64xf32, #tpu.memory_space<vmem>>, vector<48x64xf32>
    tpu.vector_store %arg3[%c0_27, %c0_28], %39 {strides = array<i32>} : memref<48x64xf32, #tpu.memory_space<vmem>>, vector<48x64xf32>,
    %c0_29 = arith.constant 0 : index
    %c0_30 = arith.constant 0 : index
    %55 = vector.load %arg4[%c0_29, %c0_30] : memref<48x64xf32, #tpu.memory_space<vmem>>, vector<48x64xf32>
    tpu.vector_store %arg4[%c0_29, %c0_30], %40 {strides = array<i32>} : memref<48x64xf32, #tpu.memory_space<vmem>>, vector<48x64xf32>,
    return
  }
}

</mosaic_0001>

<llo_original>
// kernel: gbbmr_forward.1
$region0: #{gbbmr_forward.1}
  #allocation0 [shape = 'u32[]', space=smem, size = 0x4, offset = 0x4, fixed_abs, tag = 'smem constant byte address 0x4 - core index']
  #allocation1 [shape = 'u32[144,128]{1,0:T(1,128)}', space=vmem, size = 0x12000, scoped, tag = 'internal scratch']
  %s0 = inlined_call_operand.hbm [shape: f32[504,128], index: 0, kind: input, shape index: {}]
  %s1 = inlined_call_operand.hbm [shape: f32[32,32], index: 1, kind: input, shape index: {}]
  %s2 = inlined_call_operand.vmem [shape: f32[48,3], index: 2, kind: output, shape index: {0}]
  %s3 = inlined_call_operand.vmem [shape: f32[48,64], index: 3, kind: output, shape index: {1}]
  %s4 = inlined_call_operand.vmem [shape: f32[48,64], index: 4, kind: output, shape index: {2}]
  %5 = xla_tuple %s2, %s3, %s4
  %s6 = sld [smem:[#allocation0]]
  $region42: #{gbbmr_forward.1} parent=0
    _
  %s8 = ssub.s32 1, %s6
  %s9 = scalar_select 0, %s8, %s6
  $region1: #{gbbmr_forward.1} parent=0
    #allocation2 [shape = 'u8[258048]{0}', space=vmem, size = 0x3f000, scoped, tag = 'input window, operand 0, single buffered']
    #allocation3 [shape = 's32[1]{0}', space=sflag, size = 0x4, scoped, tag = 'scoped memory for gbbmr_forward.1']
    #allocation4 [shape = 'u8[16384]{0}', space=vmem, size = 0x4000, scoped, tag = 'input window, operand 1, single buffered']
    #allocation5 [shape = 's32[1]{0}', space=sflag, size = 0x4, scoped, tag = 'scoped memory for gbbmr_forward.1']
    %10 = vsyncpa [#allocation3], 0
    %11 = vsyncpa [#allocation5], 0
    // Predicated region
    $region2: #{gbbmr_forward.1} parent=1 // pred_check
      _
    $region3: #{gbbmr_forward.1} parent=1 // pred_check_branch
      %13 = sbr.rel (0) target = $region5
    $region4: #{gbbmr_forward.1} parent=1 // pred_region
      %s15 = ssub.s32 8064, 8064
      %16 = vsyncadd [#allocation3], %s15
      %s17 = sshll.u32 [#allocation2], 4
      %s18 = int_to_ptr.vmem [resolvable:$true] %s17
      %23 = dma.hbm_to_vmem [thread:$0]  %s0, 8064, %s18, [#allocation3], 128, 128, 8
    $region5: #{gbbmr_forward.1} parent=1 // pred_fallthru
      _
    // Predicated region
    $region6: #{gbbmr_forward.1} parent=1 // pred_check
      _
    $region7: #{gbbmr_forward.1} parent=1 // pred_check_branch
      %25 = sbr.rel (0) target = $region9
    $region8: #{gbbmr_forward.1} parent=1 // pred_region
      %s27 = ssub.s32 512, 512
      %28 = vsyncadd [#allocation5], %s27
      %s29 = sshll.u32 [#allocation4], 4
      %s30 = int_to_ptr.vmem [resolvable:$true] %s29
      %35 = dma.hbm_to_vmem [thread:$0]  %s1, 512, %s30, [#allocation5], 128, 128, 8
    $region9: #{gbbmr_forward.1} parent=1 // pred_fallthru
      _
    // Predicated region
    $region10: #{gbbmr_forward.1} parent=1 // pred_check
      _
    $region11: #{gbbmr_forward.1} parent=1 // pred_check_branch
      %37 = sbr.rel (0) target = $region13
    $region12: #{gbbmr_forward.1} parent=1 // pred_region
      %38 = dma.done [#allocation3], 8064
    $region13: #{gbbmr_forward.1} parent=1 // pred_fallthru
      _
    // Predicated region
    $region14: #{gbbmr_forward.1} parent=1 // pred_check
      _
    $region15: #{gbbmr_forward.1} parent=1 // pred_check_branch
      %40 = sbr.rel (0) target = $region17
    $region16: #{gbbmr_forward.1} parent=1 // pred_region
      %41 = dma.done [#allocation5], 512
    $region17: #{gbbmr_forward.1} parent=1 // pred_fallthru
      _
    %v42 = vld [vmem:[#allocation4] sm:$0xff]
    %v43 = vld [vmem:[#allocation4 + $0x8] sm:$0xff]
    %v44 = vld [vmem:[#allocation4 + $0x10] sm:$0xff]
    %v45 = vld [vmem:[#allocation4 + $0x18] sm:$0xff]
    %v46 = vld [vmem:[#allocation2] sm:$0xff]
    %v47 = vld [vmem:[#allocation2 + $0x8] sm:$0xff]
    %v48 = vld [vmem:[#allocation2 + $0x10] sm:$0xff]
    %v49 = vld [vmem:[#allocation2 + $0x18] sm:$0xff]
    %vm50 = vcmask 261120
    %v52 = vsel %vm50, %v42, 0
    %v55 = vsel %vm50, %v43, 0
    %v58 = vsel %vm50, %v44, 0
    %v61 = vsel %vm50, %v45, 0
    %63 = vmatprep.subr.mxu0 0.0
    %64 = vmatpush1.msra.mxu0 0.0
    %65 = vmatprep.subr.mxu0 0.0
    %66 = vmatpush1.msra.mxu0 0.0
    %67 = vmatprep.subr.mxu0 0.0
    %68 = vmatpush1.msra.mxu0 0.0
    %69 = vmatprep.subr.mxu0 0.0
    %70 = vmatpush1.msra.mxu0 0.0
    %71 = vmatprep.subr.mxu0 0.0
    %72 = vmatpush1.msra.mxu0 0.0
    %73 = vmatprep.subr.mxu0 0.0
    %74 = vmatpush1.msra.mxu0 0.0
    %75 = vmatprep.subr.mxu0 0.0
    %76 = vmatpush1.msra.mxu0 0.0
    %77 = vmatprep.subr.mxu0 0.0
    %78 = vmatpush1.msra.mxu0 0.0
    %79 = vmatprep.subr.mxu0 0.0
    %80 = vmatpush1.msra.mxu0 0.0
    %81 = vmatprep.subr.mxu0 0.0
    %82 = vmatpush1.msra.mxu0 0.0
    %83 = vmatprep.subr.mxu0 0.0
    %84 = vmatpush1.msra.mxu0 0.0
    %85 = vmatprep.subr.mxu0 0.0
    %86 = vmatpush1.msra.mxu0 0.0
    %87 = vmatprep.subr.mxu0 0.0
    %88 = vmatpush1.msra.mxu0 %v49
    %89 = vmatprep.subr.mxu0 0.0
    %90 = vmatpush1.msra.mxu0 %v48
    %91 = vmatprep.subr.mxu0 0.0
    %92 = vmatpush1.msra.mxu0 %v47
    %93 = vmatprep.subr.mxu0 0.0
    %94 = vmatpush1.msra.mxu0 %v46
    %95 = vmatprep.subr.mxu0 0.0
    %96 = vmatpush2.msra.mxu0 0.0
    %97 = vmatprep.subr.mxu0 0.0
    %98 = vmatpush2.msra.mxu0 0.0
    %99 = vmatprep.subr.mxu0 0.0
    %100 = vmatpush2.msra.mxu0 0.0
    %101 = vmatprep.subr.mxu0 0.0
    %102 = vmatpush2.msra.mxu0 0.0
    %103 = vmatprep.subr.mxu0 0.0
    %104 = vmatpush2.msra.mxu0 0.0
    %105 = vmatprep.subr.mxu0 0.0
    %106 = vmatpush2.msra.mxu0 0.0
    %107 = vmatprep.subr.mxu0 0.0
    %108 = vmatpush2.msra.mxu0 0.0
    %109 = vmatprep.subr.mxu0 0.0
    %110 = vmatpush2.msra.mxu0 0.0
    %111 = vmatprep.subr.mxu0 0.0
    %112 = vmatpush2.msra.mxu0 0.0
    %113 = vmatprep.subr.mxu0 0.0
    %114 = vmatpush2.msra.mxu0 0.0
    %115 = vmatprep.subr.mxu0 0.0
    %116 = vmatpush2.msra.mxu0 0.0
    %117 = vmatprep.subr.mxu0 0.0
    %118 = vmatpush2.msra.mxu0 0.0
    %119 = vmatprep.subr.mxu0 0.0
    %120 = vmatpush2.msra.mxu0 0.0
    %121 = vmatprep.subr.mxu0 0.0
    %122 = vmatpush2.msra.mxu0 0.0
    %123 = vmatprep.subr.mxu0 0.0
    %124 = vmatpush2.msra.mxu0 0.0
    %125 = vmatprep.subr.mxu0 0.0
    %126 = vmatpush2.msra.mxu0 0.0
    %127 = vmatprep.mubr.f32.mxu0 0.0
    %128 = vmatmul.mubr.f32.gmra.mxu0 %v52
    %v129 = vpop.f32.mrf.mxu0
    %v130 = vadd.f32 0.0, %v129
    %v131 = vpop.f32.mrf.mxu0
    %132 = vmatprep.mubr.f32.mxu0 0.0
    %133 = vmatmul.mubr.f32.gmra.mxu0 %v55
    %v134 = vpop.f32.mrf.mxu0
    %v135 = vadd.f32 0.0, %v134
    %v136 = vpop.f32.mrf.mxu0
    %137 = vmatprep.mubr.f32.mxu0 0.0
    %138 = vmatmul.mubr.f32.gmra.mxu0 %v58
    %v139 = vpop.f32.mrf.mxu0
    %v140 = vadd.f32 0.0, %v139
    %v141 = vpop.f32.mrf.mxu0
    %142 = vmatprep.mubr.f32.mxu0 0.0
    %143 = vmatmul.mubr.f32.gmra.mxu0 %v61
    %v144 = vpop.f32.mrf.mxu0
    %v145 = vadd.f32 0.0, %v144
    %v146 = vpop.f32.mrf.mxu0
    %147 = vdwg.mxu0
    %v148 = vld [vmem:[#allocation2 + $0xa8] sm:$0xff]
    %v149 = vld [vmem:[#allocation2 + $0xb0] sm:$0xff]
    %v150 = vld [vmem:[#allocation2 + $0xb8] sm:$0xff]
    %v151 = vld [vmem:[#allocation2 + $0xc0] sm:$0xff]
    %v153 = vsel %vm50, %v148, 0
    %v156 = vsel %vm50, %v149, 0
    %v159 = vsel %vm50, %v150, 0
    %v162 = vsel %vm50, %v151, 0
    %164 = vmatprep.subr.mxu0 0.0
    %165 = vmatpush1.msra.mxu0 0.0
    %166 = vmatprep.subr.mxu0 0.0
    %167 = vmatpush1.msra.mxu0 0.0
    %168 = vmatprep.subr.mxu0 0.0
    %169 = vmatpush1.msra.mxu0 0.0
    %170 = vmatprep.subr.mxu0 0.0
    %171 = vmatpush1.msra.mxu0 0.0
    %172 = vmatprep.subr.mxu0 0.0
    %173 = vmatpush1.msra.mxu0 0.0
    %174 = vmatprep.subr.mxu0 0.0
    %175 = vmatpush1.msra.mxu0 0.0
    %176 = vmatprep.subr.mxu0 0.0
    %177 = vmatpush1.msra.mxu0 0.0
    %178 = vmatprep.subr.mxu0 0.0
    %179 = vmatpush1.msra.mxu0 0.0
    %180 = vmatprep.subr.mxu0 0.0
    %181 = vmatpush1.msra.mxu0 0.0
    %182 = vmatprep.subr.mxu0 0.0
    %183 = vmatpush1.msra.mxu0 0.0
    %184 = vmatprep.subr.mxu0 0.0
    %185 = vmatpush1.msra.mxu0 0.0
    %186 = vmatprep.subr.mxu0 0.0
    %187 = vmatpush1.msra.mxu0 0.0
    %188 = vmatprep.subr.mxu0 0.0
    %189 = vmatpush1.msra.mxu0 %v145
    %190 = vmatprep.subr.mxu0 0.0
    %191 = vmatpush1.msra.mxu0 %v140
    %192 = vmatprep.subr.mxu0 0.0
    %193 = vmatpush1.msra.mxu0 %v135
    %194 = vmatprep.subr.mxu0 0.0
    %195 = vmatpush1.msra.mxu0 %v130
    %196 = vmatprep.subr.mxu0 0.0
    %197 = vmatpush2.msra.mxu0 0.0
    %198 = vmatprep.subr.mxu0 0.0
    %199 = vmatpush2.msra.mxu0 0.0
    %200 = vmatprep.subr.mxu0 0.0
    %201 = vmatpush2.msra.mxu0 0.0
    %202 = vmatprep.subr.mxu0 0.0
    %203 = vmatpush2.msra.mxu0 0.0
    %204 = vmatprep.subr.mxu0 0.0
    %205 = vmatpush2.msra.mxu0 0.0
    %206 = vmatprep.subr.mxu0 0.0
    %207 = vmatpush2.msra.mxu0 0.0
    %208 = vmatprep.subr.mxu0 0.0
    %209 = vmatpush2.msra.mxu0 0.0
    %210 = vmatprep.subr.mxu0 0.0
    %211 = vmatpush2.msra.mxu0 0.0
    %212 = vmatprep.subr.mxu0 0.0
    %213 = vmatpush2.msra.mxu0 0.0
    %214 = vmatprep.subr.mxu0 0.0
    %215 = vmatpush2.msra.mxu0 0.0
    %216 = vmatprep.subr.mxu0 0.0
    %217 = vmatpush2.msra.mxu0 0.0
    %218 = vmatprep.subr.mxu0 0.0
    %219 = vmatpush2.msra.mxu0 0.0
    %220 = vmatprep.subr.mxu0 0.0
    %221 = vmatpush2.msra.mxu0 0.0
    %222 = vmatprep.subr.mxu0 0.0
    %223 = vmatpush2.msra.mxu0 0.0
    %224 = vmatprep.subr.mxu0 0.0
    %225 = vmatpush2.msra.mxu0 0.0
    %226 = vmatprep.subr.mxu0 0.0
    %227 = vmatpush2.msra.mxu0 0.0
    %228 = vmatprep.mubr.f32.mxu0 0.0
    %229 = vmatmul.mubr.f32.gmra.mxu0 %v153
    %v230 = vpop.f32.mrf.mxu0
    %v231 = vadd.f32 0.0, %v230
    %v232 = vpop.f32.mrf.mxu0
    %233 = vmatprep.mubr.f32.mxu0 0.0
    %234 = vmatmul.mubr.f32.gmra.mxu0 %v156
    %v235 = vpop.f32.mrf.mxu0
    %v236 = vadd.f32 0.0, %v235
    %v237 = vpop.f32.mrf.mxu0
    %238 = vmatprep.mubr.f32.mxu0 0.0
    %239 = vmatmul.mubr.f32.gmra.mxu0 %v159
    %v240 = vpop.f32.mrf.mxu0
    %v241 = vadd.f32 0.0, %v240
    %v242 = vpop.f32.mrf.mxu0
    %243 = vmatprep.mubr.f32.mxu0 0.0
    %244 = vmatmul.mubr.f32.gmra.mxu0 %v162
    %v245 = vpop.f32.mrf.mxu0
    %v246 = vadd.f32 0.0, %v245
    %v247 = vpop.f32.mrf.mxu0
    %248 = vdwg.mxu0
    %v249 = vld [vmem:[#allocation2 + $0xc8] sm:$0xff]
    %v250 = vld [vmem:[#allocation2 + $0xd0] sm:$0xff]
    %v251 = vld [vmem:[#allocation2 + $0xd8] sm:$0xff]
    %v252 = vld [vmem:[#allocation2 + $0xe0] sm:$0xff]
    %v254 = vsel %vm50, %v249, 0
    %v257 = vsel %vm50, %v250, 0
    %v260 = vsel %vm50, %v251, 0
    %v263 = vsel %vm50, %v252, 0
    %265 = vmatprep.subr.mxu0 0.0
    %266 = vmatpush1.msra.mxu0 0.0
    %267 = vmatprep.subr.mxu0 0.0
    %268 = vmatpush1.msra.mxu0 0.0
    %269 = vmatprep.subr.mxu0 0.0
    %270 = vmatpush1.msra.mxu0 0.0
    %271 = vmatprep.subr.mxu0 0.0
    %272 = vmatpush1.msra.mxu0 0.0
    %273 = vmatprep.subr.mxu0 0.0
    %274 = vmatpush1.msra.mxu0 0.0
    %275 = vmatprep.subr.mxu0 0.0
    %276 = vmatpush1.msra.mxu0 0.0
    %277 = vmatprep.subr.mxu0 0.0
    %278 = vmatpush1.msra.mxu0 0.0
    %279 = vmatprep.subr.mxu0 0.0
    %280 = vmatpush1.msra.mxu0 0.0
    %281 = vmatprep.subr.mxu0 0.0
    %282 = vmatpush1.msra.mxu0 0.0
    %283 = vmatprep.subr.mxu0 0.0
    %284 = vmatpush1.msra.mxu0 0.0
    %285 = vmatprep.subr.mxu0 0.0
    %286 = vmatpush1.msra.mxu0 0.0
    %287 = vmatprep.subr.mxu0 0.0
    %288 = vmatpush1.msra.mxu0 0.0
    %289 = vmatprep.subr.mxu0 0.0
    %290 = vmatpush1.msra.mxu0 %v145
    %291 = vmatprep.subr.mxu0 0.0
    %292 = vmatpush1.msra.mxu0 %v140
    %293 = vmatprep.subr.mxu0 0.0
    %294 = vmatpush1.msra.mxu0 %v135
    %295 = vmatprep.subr.mxu0 0.0
    %296 = vmatpush1.msra.mxu0 %v130
    %297 = vmatprep.subr.mxu0 0.0
    %298 = vmatpush2.msra.mxu0 0.0
    %299 = vmatprep.subr.mxu0 0.0
    %300 = vmatpush2.msra.mxu0 0.0
    %301 = vmatprep.subr.mxu0 0.0
    %302 = vmatpush2.msra.mxu0 0.0
    %303 = vmatprep.subr.mxu0 0.0
    %304 = vmatpush2.msra.mxu0 0.0
    %305 = vmatprep.subr.mxu0 0.0
    %306 = vmatpush2.msra.mxu0 0.0
    %307 = vmatprep.subr.mxu0 0.0
    %308 = vmatpush2.msra.mxu0 0.0
    %309 = vmatprep.subr.mxu0 0.0
    %310 = vmatpush2.msra.mxu0 0.0
    %311 = vmatprep.subr.mxu0 0.0
    %312 = vmatpush2.msra.mxu0 0.0
    %313 = vmatprep.subr.mxu0 0.0
    %314 = vmatpush2.msra.mxu0 0.0
    %315 = vmatprep.subr.mxu0 0.0
    %316 = vmatpush2.msra.mxu0 0.0
    %317 = vmatprep.subr.mxu0 0.0
    %318 = vmatpush2.msra.mxu0 0.0
    %319 = vmatprep.subr.mxu0 0.0
    %320 = vmatpush2.msra.mxu0 0.0
    %321 = vmatprep.subr.mxu0 0.0
    %322 = vmatpush2.msra.mxu0 0.0
    %323 = vmatprep.subr.mxu0 0.0
    %324 = vmatpush2.msra.mxu0 0.0
    %325 = vmatprep.subr.mxu0 0.0
    %326 = vmatpush2.msra.mxu0 0.0
    %327 = vmatprep.subr.mxu0 0.0
    %328 = vmatpush2.msra.mxu0 0.0
    %329 = vmatprep.mubr.f32.mxu0 0.0
    %330 = vmatmul.mubr.f32.gmra.mxu0 %v254
    %v331 = vpop.f32.mrf.mxu0
    %v332 = vadd.f32 0.0, %v331
    %v333 = vpop.f32.mrf.mxu0
    %334 = vmatprep.mubr.f32.mxu0 0.0
    %335 = vmatmul.mubr.f32.gmra.mxu0 %v257
    %v336 = vpop.f32.mrf.mxu0
    %v337 = vadd.f32 0.0, %v336
    %v338 = vpop.f32.mrf.mxu0
    %339 = vmatprep.mubr.f32.mxu0 0.0
    %340 = vmatmul.mubr.f32.gmra.mxu0 %v260
    %v341 = vpop.f32.mrf.mxu0
    %v342 = vadd.f32 0.0, %v341
    %v343 = vpop.f32.mrf.mxu0
    %344 = vmatprep.mubr.f32.mxu0 0.0
    %345 = vmatmul.mubr.f32.gmra.mxu0 %v263
    %v346 = vpop.f32.mrf.mxu0
    %v347 = vadd.f32 0.0, %v346
    %v348 = vpop.f32.mrf.mxu0
    %349 = vdwg.mxu0
    %v350 = vlaneseq
    %v351 = vand.u32 %v350, 127
    %vm352 = vcmp.lt.s32.totalorder %v351, 64
    %v353 = vsel %vm352, %v231, %v332
    %v354 = vsel %vm352, %v236, %v337
    %v355 = vsel %vm352, %v241, %v342
    %v356 = vsel %vm352, %v246, %v347
    %v357 = vld [vmem:[#allocation2 + $0xa0] sm:$0x1]
    %v358 = vlaneseq
    %v359 = vshrl.u32 %v358, 7
    %v360 = vsub.s32 0, %v359
    %v361 = vrot.slane %v357, %v360
    %v362 = vadd.f32 %v353, %v361
    %v363 = vadd.f32 %v354, %v361
    %v364 = vadd.f32 %v355, %v361
    %v365 = vadd.f32 %v356, %v361
    %vm366 = vcmp.ge.f32.partialorder %v362, 0.0
    %vm367 = vcmp.ge.f32.partialorder %v363, 0.0
    %vm368 = vcmp.ge.f32.partialorder %v364, 0.0
    %vm369 = vcmp.ge.f32.partialorder %v365, 0.0
    %v370 = vmul.f32 %v362, 0.1
    %v371 = vmul.f32 %v363, 0.1
    %v372 = vmul.f32 %v364, 0.1
    %v373 = vmul.f32 %v365, 0.1
    %v374 = vsel %vm366, %v362, %v370
    %v375 = vsel %vm367, %v363, %v371
    %v376 = vsel %vm368, %v364, %v372
    %v377 = vsel %vm369, %v365, %v373
    %v378 = vld [vmem:[#allocation2 + $0x20] sm:$0xff]
    %v379 = vld [vmem:[#allocation2 + $0x28] sm:$0xff]
    %v380 = vld [vmem:[#allocation2 + $0x30] sm:$0xff]
    %v381 = vld [vmem:[#allocation2 + $0x38] sm:$0xff]
    %v382 = vld [vmem:[#allocation2 + $0x40] sm:$0xff]
    %v383 = vld [vmem:[#allocation2 + $0x48] sm:$0xff]
    %v384 = vld [vmem:[#allocation2 + $0x50] sm:$0xff]
    %v385 = vld [vmem:[#allocation2 + $0x58] sm:$0xff]
    %v386 = vld [vmem:[#allocation2 + $0x60] sm:$0xff]
    %v387 = vld [vmem:[#allocation2 + $0x68] sm:$0xff]
    %v388 = vld [vmem:[#allocation2 + $0x70] sm:$0xff]
    %v389 = vld [vmem:[#allocation2 + $0x78] sm:$0xff]
    %v390 = vld [vmem:[#allocation2 + $0x80] sm:$0xff]
    %v391 = vld [vmem:[#allocation2 + $0x88] sm:$0xff]
    %v392 = vld [vmem:[#allocation2 + $0x90] sm:$0xff]
    %v393 = vld [vmem:[#allocation2 + $0x98] sm:$0xff]
    %394 = vmatprep.subr.mxu0 0.0
    %395 = vmatpush1.msra.mxu0 %v393
    %396 = vmatprep.subr.mxu0 0.0
    %397 = vmatpush1.msra.mxu0 %v392
    %398 = vmatprep.subr.mxu0 0.0
    %399 = vmatpush1.msra.mxu0 %v391
    %400 = vmatprep.subr.mxu0 0.0
    %401 = vmatpush1.msra.mxu0 %v390
    %402 = vmatprep.subr.mxu0 0.0
    %403 = vmatpush1.msra.mxu0 %v389
    %404 = vmatprep.subr.mxu0 0.0
    %405 = vmatpush1.msra.mxu0 %v388
    %406 = vmatprep.subr.mxu0 0.0
    %407 = vmatpush1.msra.mxu0 %v387
    %408 = vmatprep.subr.mxu0 0.0
    %409 = vmatpush1.msra.mxu0 %v386
    %410 = vmatprep.subr.mxu0 0.0
    %411 = vmatpush1.msra.mxu0 %v385
    %412 = vmatprep.subr.mxu0 0.0
    %413 = vmatpush1.msra.mxu0 %v384
    %414 = vmatprep.subr.mxu0 0.0
    %415 = vmatpush1.msra.mxu0 %v383
    %416 = vmatprep.subr.mxu0 0.0
    %417 = vmatpush1.msra.mxu0 %v382
    %418 = vmatprep.subr.mxu0 0.0
    %419 = vmatpush1.msra.mxu0 %v381
    %420 = vmatprep.subr.mxu0 0.0
    %421 = vmatpush1.msra.mxu0 %v380
    %422 = vmatprep.subr.mxu0 0.0
    %423 = vmatpush1.msra.mxu0 %v379
    %424 = vmatprep.subr.mxu0 0.0
    %425 = vmatpush1.msra.mxu0 %v378
    %426 = vmatprep.subr.mxu0 0.0
    %427 = vmatpush2.msra.mxu0 0.0
    %428 = vmatprep.subr.mxu0 0.0
    %429 = vmatpush2.msra.mxu0 0.0
    %430 = vmatprep.subr.mxu0 0.0
    %431 = vmatpush2.msra.mxu0 0.0
    %432 = vmatprep.subr.mxu0 0.0
    %433 = vmatpush2.msra.mxu0 0.0
    %434 = vmatprep.subr.mxu0 0.0
    %435 = vmatpush2.msra.mxu0 0.0
    %436 = vmatprep.subr.mxu0 0.0
    %437 = vmatpush2.msra.mxu0 0.0
    %438 = vmatprep.subr.mxu0 0.0
    %439 = vmatpush2.msra.mxu0 0.0
    %440 = vmatprep.subr.mxu0 0.0
    %441 = vmatpush2.msra.mxu0 0.0
    %442 = vmatprep.subr.mxu0 0.0
    %443 = vmatpush2.msra.mxu0 0.0
    %444 = vmatprep.subr.mxu0 0.0
    %445 = vmatpush2.msra.mxu0 0.0
    %446 = vmatprep.subr.mxu0 0.0
    %447 = vmatpush2.msra.mxu0 0.0
    %448 = vmatprep.subr.mxu0 0.0
    %449 = vmatpush2.msra.mxu0 0.0
    %450 = vmatprep.subr.mxu0 0.0
    %451 = vmatpush2.msra.mxu0 0.0
    %452 = vmatprep.subr.mxu0 0.0
    %453 = vmatpush2.msra.mxu0 0.0
    %454 = vmatprep.subr.mxu0 0.0
    %455 = vmatpush2.msra.mxu0 0.0
    %456 = vmatprep.subr.mxu0 0.0
    %457 = vmatpush2.msra.mxu0 0.0
    %458 = vmatprep.mubr.f32.mxu0 0.0
    %459 = vmatmul.mubr.f32.gmra.mxu0 %v374
    %v460 = vpop.f32.mrf.mxu0
    %v461 = vadd.f32 0.0, %v460
    %v462 = vpop.f32.mrf.mxu0
    %463 = vmatprep.mubr.f32.mxu0 0.0
    %464 = vmatmul.mubr.f32.gmra.mxu0 %v375
    %v465 = vpop.f32.mrf.mxu0
    %v466 = vadd.f32 0.0, %v465
    %v467 = vpop.f32.mrf.mxu0
    %468 = vmatprep.mubr.f32.mxu0 0.0
    %469 = vmatmul.mubr.f32.gmra.mxu0 %v376
    %v470 = vpop.f32.mrf.mxu0
    %v471 = vadd.f32 0.0, %v470
    %v472 = vpop.f32.mrf.mxu0
    %473 = vmatprep.mubr.f32.mxu0 0.0
    %474 = vmatmul.mubr.f32.gmra.mxu0 %v377
    %v475 = vpop.f32.mrf.mxu0
    %v476 = vadd.f32 0.0, %v475
    %v477 = vpop.f32.mrf.mxu0
    %478 = vdwg.mxu0
    %v479 = vld [vmem:[#allocation2 + $0xe8] sm:$0xff]
    %v480 = vld [vmem:[#allocation2 + $0xf0] sm:$0xff]
    %v481 = vld [vmem:[#allocation2 + $0xf8] sm:$0xff]
    %v482 = vld [vmem:[#allocation2 + $0x100] sm:$0xff]
    %v483 = vld [vmem:[#allocation2 + $0x108] sm:$0xff]
    %v484 = vld [vmem:[#allocation2 + $0x110] sm:$0xff]
    %v486 = vsel %vm50, %v479, 0
    %v489 = vsel %vm50, %v480, 0
    %v492 = vsel %vm50, %v481, 0
    %v495 = vsel %vm50, %v482, 0
    %v498 = vsel %vm50, %v483, 0
    %v501 = vsel %vm50, %v484, 0
    %503 = vmatprep.subr.mxu0 0.0
    %504 = vmatpush1.msra.mxu0 0.0
    %505 = vmatprep.subr.mxu0 0.0
    %506 = vmatpush1.msra.mxu0 0.0
    %507 = vmatprep.subr.mxu0 0.0
    %508 = vmatpush1.msra.mxu0 0.0
    %509 = vmatprep.subr.mxu0 0.0
    %510 = vmatpush1.msra.mxu0 0.0
    %511 = vmatprep.subr.mxu0 0.0
    %512 = vmatpush1.msra.mxu0 0.0
    %513 = vmatprep.subr.mxu0 0.0
    %514 = vmatpush1.msra.mxu0 0.0
    %515 = vmatprep.subr.mxu0 0.0
    %516 = vmatpush1.msra.mxu0 0.0
    %517 = vmatprep.subr.mxu0 0.0
    %518 = vmatpush1.msra.mxu0 0.0
    %519 = vmatprep.subr.mxu0 0.0
    %520 = vmatpush1.msra.mxu0 0.0
    %521 = vmatprep.subr.mxu0 0.0
    %522 = vmatpush1.msra.mxu0 0.0
    %523 = vmatprep.subr.mxu0 0.0
    %524 = vmatpush1.msra.mxu0 0.0
    %525 = vmatprep.subr.mxu0 0.0
    %526 = vmatpush1.msra.mxu0 0.0
    %527 = vmatprep.subr.mxu0 0.0
    %528 = vmatpush1.msra.mxu0 %v476
    %529 = vmatprep.subr.mxu0 0.0
    %530 = vmatpush1.msra.mxu0 %v471
    %531 = vmatprep.subr.mxu0 0.0
    %532 = vmatpush1.msra.mxu0 %v466
    %533 = vmatprep.subr.mxu0 0.0
    %534 = vmatpush1.msra.mxu0 %v461
    %535 = vmatprep.subr.mxu0 0.0
    %536 = vmatpush2.msra.mxu0 0.0
    %537 = vmatprep.subr.mxu0 0.0
    %538 = vmatpush2.msra.mxu0 0.0
    %539 = vmatprep.subr.mxu0 0.0
    %540 = vmatpush2.msra.mxu0 0.0
    %541 = vmatprep.subr.mxu0 0.0
    %542 = vmatpush2.msra.mxu0 0.0
    %543 = vmatprep.subr.mxu0 0.0
    %544 = vmatpush2.msra.mxu0 0.0
    %545 = vmatprep.subr.mxu0 0.0
    %546 = vmatpush2.msra.mxu0 0.0
    %547 = vmatprep.subr.mxu0 0.0
    %548 = vmatpush2.msra.mxu0 0.0
    %549 = vmatprep.subr.mxu0 0.0
    %550 = vmatpush2.msra.mxu0 0.0
    %551 = vmatprep.subr.mxu0 0.0
    %552 = vmatpush2.msra.mxu0 0.0
    %553 = vmatprep.subr.mxu0 0.0
    %554 = vmatpush2.msra.mxu0 0.0
    %555 = vmatprep.subr.mxu0 0.0
    %556 = vmatpush2.msra.mxu0 0.0
    %557 = vmatprep.subr.mxu0 0.0
    %558 = vmatpush2.msra.mxu0 0.0
    %559 = vmatprep.subr.mxu0 0.0
    %560 = vmatpush2.msra.mxu0 0.0
    %561 = vmatprep.subr.mxu0 0.0
    %562 = vmatpush2.msra.mxu0 0.0
    %563 = vmatprep.subr.mxu0 0.0
    %564 = vmatpush2.msra.mxu0 0.0
    %565 = vmatprep.subr.mxu0 0.0
    %566 = vmatpush2.msra.mxu0 0.0
    %567 = vmatprep.mubr.f32.mxu0 0.0
    %568 = vmatmul.mubr.f32.gmra.mxu0 %v486
    %v569 = vpop.f32.mrf.mxu0
    %v570 = vadd.f32 0.0, %v569
    %v571 = vpop.f32.mrf.mxu0
    %572 = vmatprep.mubr.f32.mxu0 0.0
    %573 = vmatmul.mubr.f32.gmra.mxu0 %v489
    %v574 = vpop.f32.mrf.mxu0
    %v575 = vadd.f32 0.0, %v574
    %v576 = vpop.f32.mrf.mxu0
    %577 = vmatprep.mubr.f32.mxu0 0.0
    %578 = vmatmul.mubr.f32.gmra.mxu0 %v492
    %v579 = vpop.f32.mrf.mxu0
    %v580 = vadd.f32 0.0, %v579
    %v581 = vpop.f32.mrf.mxu0
    %582 = vmatprep.mubr.f32.mxu0 0.0
    %583 = vmatmul.mubr.f32.gmra.mxu0 %v495
    %v584 = vpop.f32.mrf.mxu0
    %v585 = vadd.f32 0.0, %v584
    %v586 = vpop.f32.mrf.mxu0
    %587 = vmatprep.mubr.f32.mxu0 0.0
    %588 = vmatmul.mubr.f32.gmra.mxu0 %v498
    %v589 = vpop.f32.mrf.mxu0
    %v590 = vadd.f32 0.0, %v589
    %v591 = vpop.f32.mrf.mxu0
    %592 = vmatprep.mubr.f32.mxu0 0.0
    %593 = vmatmul.mubr.f32.gmra.mxu0 %v501
    %v594 = vpop.f32.mrf.mxu0
    %v595 = vadd.f32 0.0, %v594
    %v596 = vpop.f32.mrf.mxu0
    %597 = vdwg.mxu0
    %v598 = vld [vmem:[#allocation2 + $0x148] sm:$0xff]
    %v599 = vld [vmem:[#allocation2 + $0x150] sm:$0xff]
    %v600 = vld [vmem:[#allocation2 + $0x158] sm:$0xff]
    %v601 = vld [vmem:[#allocation2 + $0x160] sm:$0xff]
    %v602 = vld [vmem:[#allocation2 + $0x168] sm:$0xff]
    %v603 = vld [vmem:[#allocation2 + $0x170] sm:$0xff]
    %v604 = vadd.f32 %v570, %v598
    %v605 = vadd.f32 %v575, %v599
    %v606 = vadd.f32 %v580, %v600
    %v607 = vadd.f32 %v585, %v601
    %v608 = vadd.f32 %v590, %v602
    %v609 = vadd.f32 %v595, %v603
    %v610 = vld [vmem:[#allocation2 + $0x118] sm:$0xff]
    %v611 = vld [vmem:[#allocation2 + $0x120] sm:$0xff]
    %v612 = vld [vmem:[#allocation2 + $0x128] sm:$0xff]
    %v613 = vld [vmem:[#allocation2 + $0x130] sm:$0xff]
    %v614 = vld [vmem:[#allocation2 + $0x138] sm:$0xff]
    %v615 = vld [vmem:[#allocation2 + $0x140] sm:$0xff]
    %v617 = vsel %vm50, %v610, 0
    %v620 = vsel %vm50, %v611, 0
    %v623 = vsel %vm50, %v612, 0
    %v626 = vsel %vm50, %v613, 0
    %v629 = vsel %vm50, %v614, 0
    %v632 = vsel %vm50, %v615, 0
    %634 = vmatprep.subr.mxu0 0.0
    %635 = vmatpush1.msra.mxu0 0.0
    %636 = vmatprep.subr.mxu0 0.0
    %637 = vmatpush1.msra.mxu0 0.0
    %638 = vmatprep.subr.mxu0 0.0
    %639 = vmatpush1.msra.mxu0 0.0
    %640 = vmatprep.subr.mxu0 0.0
    %641 = vmatpush1.msra.mxu0 0.0
    %642 = vmatprep.subr.mxu0 0.0
    %643 = vmatpush1.msra.mxu0 0.0
    %644 = vmatprep.subr.mxu0 0.0
    %645 = vmatpush1.msra.mxu0 0.0
    %646 = vmatprep.subr.mxu0 0.0
    %647 = vmatpush1.msra.mxu0 0.0
    %648 = vmatprep.subr.mxu0 0.0
    %649 = vmatpush1.msra.mxu0 0.0
    %650 = vmatprep.subr.mxu0 0.0
    %651 = vmatpush1.msra.mxu0 0.0
    %652 = vmatprep.subr.mxu0 0.0
    %653 = vmatpush1.msra.mxu0 0.0
    %654 = vmatprep.subr.mxu0 0.0
    %655 = vmatpush1.msra.mxu0 0.0
    %656 = vmatprep.subr.mxu0 0.0
    %657 = vmatpush1.msra.mxu0 0.0
    %658 = vmatprep.subr.mxu0 0.0
    %659 = vmatpush1.msra.mxu0 %v476
    %660 = vmatprep.subr.mxu0 0.0
    %661 = vmatpush1.msra.mxu0 %v471
    %662 = vmatprep.subr.mxu0 0.0
    %663 = vmatpush1.msra.mxu0 %v466
    %664 = vmatprep.subr.mxu0 0.0
    %665 = vmatpush1.msra.mxu0 %v461
    %666 = vmatprep.subr.mxu0 0.0
    %667 = vmatpush2.msra.mxu0 0.0
    %668 = vmatprep.subr.mxu0 0.0
    %669 = vmatpush2.msra.mxu0 0.0
    %670 = vmatprep.subr.mxu0 0.0
    %671 = vmatpush2.msra.mxu0 0.0
    %672 = vmatprep.subr.mxu0 0.0
    %673 = vmatpush2.msra.mxu0 0.0
    %674 = vmatprep.subr.mxu0 0.0
    %675 = vmatpush2.msra.mxu0 0.0
    %676 = vmatprep.subr.mxu0 0.0
    %677 = vmatpush2.msra.mxu0 0.0
    %678 = vmatprep.subr.mxu0 0.0
    %679 = vmatpush2.msra.mxu0 0.0
    %680 = vmatprep.subr.mxu0 0.0
    %681 = vmatpush2.msra.mxu0 0.0
    %682 = vmatprep.subr.mxu0 0.0
    %683 = vmatpush2.msra.mxu0 0.0
    %684 = vmatprep.subr.mxu0 0.0
    %685 = vmatpush2.msra.mxu0 0.0
    %686 = vmatprep.subr.mxu0 0.0
    %687 = vmatpush2.msra.mxu0 0.0
    %688 = vmatprep.subr.mxu0 0.0
    %689 = vmatpush2.msra.mxu0 0.0
    %690 = vmatprep.subr.mxu0 0.0
    %691 = vmatpush2.msra.mxu0 0.0
    %692 = vmatprep.subr.mxu0 0.0
    %693 = vmatpush2.msra.mxu0 0.0
    %694 = vmatprep.subr.mxu0 0.0
    %695 = vmatpush2.msra.mxu0 0.0
    %696 = vmatprep.subr.mxu0 0.0
    %697 = vmatpush2.msra.mxu0 0.0
    %698 = vmatprep.mubr.f32.mxu0 0.0
    %699 = vmatmul.mubr.f32.gmra.mxu0 %v617
    %v700 = vpop.f32.mrf.mxu0
    %v701 = vadd.f32 0.0, %v700
    %v702 = vpop.f32.mrf.mxu0
    %703 = vmatprep.mubr.f32.mxu0 0.0
    %704 = vmatmul.mubr.f32.gmra.mxu0 %v620
    %v705 = vpop.f32.mrf.mxu0
    %v706 = vadd.f32 0.0, %v705
    %v707 = vpop.f32.mrf.mxu0
    %708 = vmatprep.mubr.f32.mxu0 0.0
    %709 = vmatmul.mubr.f32.gmra.mxu0 %v623
    %v710 = vpop.f32.mrf.mxu0
    %v711 = vadd.f32 0.0, %v710
    %v712 = vpop.f32.mrf.mxu0
    %713 = vmatprep.mubr.f32.mxu0 0.0
    %714 = vmatmul.mubr.f32.gmra.mxu0 %v626
    %v715 = vpop.f32.mrf.mxu0
    %v716 = vadd.f32 0.0, %v715
    %v717 = vpop.f32.mrf.mxu0
    %718 = vmatprep.mubr.f32.mxu0 0.0
    %719 = vmatmul.mubr.f32.gmra.mxu0 %v629
    %v720 = vpop.f32.mrf.mxu0
    %v721 = vadd.f32 0.0, %v720
    %v722 = vpop.f32.mrf.mxu0
    %723 = vmatprep.mubr.f32.mxu0 0.0
    %724 = vmatmul.mubr.f32.gmra.mxu0 %v632
    %v725 = vpop.f32.mrf.mxu0
    %v726 = vadd.f32 0.0, %v725
    %v727 = vpop.f32.mrf.mxu0
    %728 = vdwg.mxu0
    %v729 = vld [vmem:[#allocation2 + $0x178] sm:$0xff]
    %v730 = vld [vmem:[#allocation2 + $0x180] sm:$0xff]
    %v731 = vld [vmem:[#allocation2 + $0x188] sm:$0xff]
    %v732 = vld [vmem:[#allocation2 + $0x190] sm:$0xff]
    %v733 = vld [vmem:[#allocation2 + $0x198] sm:$0xff]
    %v734 = vld [vmem:[#allocation2 + $0x1a0] sm:$0xff]
    %741 = vrot.lane.b32.xlu0 %v729, 64
    %v742 = vpop.permute.xlu0 %741
    %743 = vrot.lane.b32.xlu0 %v730, 64
    %v744 = vpop.permute.xlu0 %743
    %745 = vrot.lane.b32.xlu0 %v731, 64
    %v746 = vpop.permute.xlu0 %745
    %747 = vrot.lane.b32.xlu0 %v732, 64
    %v748 = vpop.permute.xlu0 %747
    %749 = vrot.lane.b32.xlu0 %v733, 64
    %v750 = vpop.permute.xlu0 %749
    %751 = vrot.lane.b32.xlu0 %v734, 64
    %v752 = vpop.permute.xlu0 %751
    %v759 = vadd.f32 %v701, %v742
    %v760 = vadd.f32 %v706, %v744
    %v761 = vadd.f32 %v711, %v746
    %v762 = vadd.f32 %v716, %v748
    %v763 = vadd.f32 %v721, %v750
    %v764 = vadd.f32 %v726, %v752
    %vm765 = vcmask 523264
    %v766 = vsel %vm765, %v604, -inf
    %767 = vmax.xlane.f32.xlu0 %v766
    %v768 = vpop.xlane.xlu0 %767
    %v769 = vsel %vm765, %v605, -inf
    %770 = vmax.xlane.f32.xlu0 %v769
    %v771 = vpop.xlane.xlu0 %770
    %v772 = vsel %vm765, %v606, -inf
    %773 = vmax.xlane.f32.xlu0 %v772
    %v774 = vpop.xlane.xlu0 %773
    %v775 = vsel %vm765, %v607, -inf
    %776 = vmax.xlane.f32.xlu0 %v775
    %v777 = vpop.xlane.xlu0 %776
    %v778 = vsel %vm765, %v608, -inf
    %779 = vmax.xlane.f32.xlu0 %v778
    %v780 = vpop.xlane.xlu0 %779
    %v781 = vsel %vm765, %v609, -inf
    %782 = vmax.xlane.f32.xlu0 %v781
    %v783 = vpop.xlane.xlu0 %782
    %v784 = vsub.f32 %v604, %v768
    %v785 = vsub.f32 %v605, %v771
    %v786 = vsub.f32 %v606, %v774
    %v787 = vsub.f32 %v607, %v777
    %v788 = vsub.f32 %v608, %v780
    %v789 = vsub.f32 %v609, %v783
    %v790 = vmul.f32 %v784, 1.442695
    %v791 = vpow.pop %v790
    %v792 = vmul.f32 %v785, 1.442695
    %v793 = vpow.pop %v792
    %v794 = vmul.f32 %v786, 1.442695
    %v795 = vpow.pop %v794
    %v796 = vmul.f32 %v787, 1.442695
    %v797 = vpow.pop %v796
    %v798 = vmul.f32 %v788, 1.442695
    %v799 = vpow.pop %v798
    %v800 = vmul.f32 %v789, 1.442695
    %v801 = vpow.pop %v800
    %v802 = vsel %vm765, %v791, 0.0
    %803 = vadd.xlane.f32.xlu0 %v802
    %v804 = vpop.xlane.xlu0 %803
    %v805 = vsel %vm765, %v793, 0.0
    %806 = vadd.xlane.f32.xlu0 %v805
    %v807 = vpop.xlane.xlu0 %806
    %v808 = vsel %vm765, %v795, 0.0
    %809 = vadd.xlane.f32.xlu0 %v808
    %v810 = vpop.xlane.xlu0 %809
    %v811 = vsel %vm765, %v797, 0.0
    %812 = vadd.xlane.f32.xlu0 %v811
    %v813 = vpop.xlane.xlu0 %812
    %v814 = vsel %vm765, %v799, 0.0
    %815 = vadd.xlane.f32.xlu0 %v814
    %v816 = vpop.xlane.xlu0 %815
    %v817 = vsel %vm765, %v801, 0.0
    %818 = vadd.xlane.f32.xlu0 %v817
    %v819 = vpop.xlane.xlu0 %818
    %v820 = vrcp.pop %v804
    %v821 = vmul.f32 %v791, %v820
    %v822 = vrcp.pop %v807
    %v823 = vmul.f32 %v793, %v822
    %v824 = vrcp.pop %v810
    %v825 = vmul.f32 %v795, %v824
    %v826 = vrcp.pop %v813
    %v827 = vmul.f32 %v797, %v826
    %v828 = vrcp.pop %v816
    %v829 = vmul.f32 %v799, %v828
    %v830 = vrcp.pop %v819
    %v831 = vmul.f32 %v801, %v830
    %838 = vrot.lane.b32.xlu0 %v759, 64
    %v839 = vpop.permute.xlu0 %838
    %840 = vrot.lane.b32.xlu0 %v760, 64
    %v841 = vpop.permute.xlu0 %840
    %842 = vrot.lane.b32.xlu0 %v761, 64
    %v843 = vpop.permute.xlu0 %842
    %844 = vrot.lane.b32.xlu0 %v762, 64
    %v845 = vpop.permute.xlu0 %844
    %846 = vrot.lane.b32.xlu0 %v763, 64
    %v847 = vpop.permute.xlu0 %846
    %848 = vrot.lane.b32.xlu0 %v764, 64
    %v849 = vpop.permute.xlu0 %848
    %v856 = vmul.f32 %v821, %v839
    %v857 = vmul.f32 %v823, %v841
    %v858 = vmul.f32 %v825, %v843
    %v859 = vmul.f32 %v827, %v845
    %v860 = vmul.f32 %v829, %v847
    %v861 = vmul.f32 %v831, %v849
    %v862 = vsel %vm765, %v856, 0.0
    %863 = vadd.xlane.f32.xlu0 %v862
    %v864 = vpop.xlane.xlu0 %863
    %v865 = vsel %vm765, %v857, 0.0
    %866 = vadd.xlane.f32.xlu0 %v865
    %v867 = vpop.xlane.xlu0 %866
    %v868 = vsel %vm765, %v858, 0.0
    %869 = vadd.xlane.f32.xlu0 %v868
    %v870 = vpop.xlane.xlu0 %869
    %v871 = vsel %vm765, %v859, 0.0
    %872 = vadd.xlane.f32.xlu0 %v871
    %v873 = vpop.xlane.xlu0 %872
    %v874 = vsel %vm765, %v860, 0.0
    %875 = vadd.xlane.f32.xlu0 %v874
    %v876 = vpop.xlane.xlu0 %875
    %v877 = vsel %vm765, %v861, 0.0
    %878 = vadd.xlane.f32.xlu0 %v877
    %v879 = vpop.xlane.xlu0 %878
    %v880 = vld [vmem:[#allocation2 + $0x1a8] sm:$0xff]
    %v881 = vld [vmem:[#allocation2 + $0x1b0] sm:$0xff]
    %v882 = vld [vmem:[#allocation2 + $0x1b8] sm:$0xff]
    %v883 = vld [vmem:[#allocation2 + $0x1c0] sm:$0xff]
    %v884 = vld [vmem:[#allocation2 + $0x1c8] sm:$0xff]
    %v885 = vld [vmem:[#allocation2 + $0x1d0] sm:$0xff]
    %v886 = vld [vmem:[#allocation2 + $0x1d8] sm:$0xff]
    %v887 = vld [vmem:[#allocation2 + $0x1e0] sm:$0xff]
    %v888 = vld [vmem:[#allocation2 + $0x1e8] sm:$0x1]
    %v889 = vlaneseq
    %v890 = vshrl.u32 %v889, 7
    %v891 = vsub.s32 0, %v890
    %v892 = vrot.slane %v888, %v891
    %v894 = vsel %vm765, %v821, 0
    %v897 = vsel %vm765, %v823, 0
    %v900 = vsel %vm765, %v825, 0
    %v903 = vsel %vm765, %v827, 0
    %v906 = vsel %vm765, %v829, 0
    %v909 = vsel %vm765, %v831, 0
    %911 = vmatprep.subr.mxu0 0.0
    %912 = vmatpush1.msra.mxu0 0.0
    %913 = vmatprep.subr.mxu0 0.0
    %914 = vmatpush1.msra.mxu0 0.0
    %915 = vmatprep.subr.mxu0 0.0
    %916 = vmatpush1.msra.mxu0 0.0
    %917 = vmatprep.subr.mxu0 0.0
    %918 = vmatpush1.msra.mxu0 0.0
    %919 = vmatprep.subr.mxu0 0.0
    %920 = vmatpush1.msra.mxu0 0.0
    %921 = vmatprep.subr.mxu0 0.0
    %922 = vmatpush1.msra.mxu0 0.0
    %923 = vmatprep.subr.mxu0 0.0
    %924 = vmatpush1.msra.mxu0 0.0
    %925 = vmatprep.subr.mxu0 0.0
    %926 = vmatpush1.msra.mxu0 0.0
    %927 = vmatprep.subr.mxu0 0.0
    %928 = vmatpush1.msra.mxu0 %v887
    %929 = vmatprep.subr.mxu0 0.0
    %930 = vmatpush1.msra.mxu0 %v886
    %931 = vmatprep.subr.mxu0 0.0
    %932 = vmatpush1.msra.mxu0 %v885
    %933 = vmatprep.subr.mxu0 0.0
    %934 = vmatpush1.msra.mxu0 %v884
    %935 = vmatprep.subr.mxu0 0.0
    %936 = vmatpush1.msra.mxu0 %v883
    %937 = vmatprep.subr.mxu0 0.0
    %938 = vmatpush1.msra.mxu0 %v882
    %939 = vmatprep.subr.mxu0 0.0
    %940 = vmatpush1.msra.mxu0 %v881
    %941 = vmatprep.subr.mxu0 0.0
    %942 = vmatpush1.msra.mxu0 %v880
    %943 = vmatprep.subr.mxu0 0.0
    %944 = vmatpush2.msra.mxu0 0.0
    %945 = vmatprep.subr.mxu0 0.0
    %946 = vmatpush2.msra.mxu0 0.0
    %947 = vmatprep.subr.mxu0 0.0
    %948 = vmatpush2.msra.mxu0 0.0
    %949 = vmatprep.subr.mxu0 0.0
    %950 = vmatpush2.msra.mxu0 0.0
    %951 = vmatprep.subr.mxu0 0.0
    %952 = vmatpush2.msra.mxu0 0.0
    %953 = vmatprep.subr.mxu0 0.0
    %954 = vmatpush2.msra.mxu0 0.0
    %955 = vmatprep.subr.mxu0 0.0
    %956 = vmatpush2.msra.mxu0 0.0
    %957 = vmatprep.subr.mxu0 0.0
    %958 = vmatpush2.msra.mxu0 0.0
    %959 = vmatprep.subr.mxu0 0.0
    %960 = vmatpush2.msra.mxu0 0.0
    %961 = vmatprep.subr.mxu0 0.0
    %962 = vmatpush2.msra.mxu0 0.0
    %963 = vmatprep.subr.mxu0 0.0
    %964 = vmatpush2.msra.mxu0 0.0
    %965 = vmatprep.subr.mxu0 0.0
    %966 = vmatpush2.msra.mxu0 0.0
    %967 = vmatprep.subr.mxu0 0.0
    %968 = vmatpush2.msra.mxu0 0.0
    %969 = vmatprep.subr.mxu0 0.0
    %970 = vmatpush2.msra.mxu0 0.0
    %971 = vmatprep.subr.mxu0 0.0
    %972 = vmatpush2.msra.mxu0 0.0
    %973 = vmatprep.subr.mxu0 0.0
    %974 = vmatpush2.msra.mxu0 0.0
    %975 = vmatprep.mubr.f32.mxu0 0.0
    %976 = vmatmul.mubr.f32.gmra.mxu0 %v894
    %v977 = vpop.f32.mrf.mxu0
    %v978 = vadd.f32 %v892, %v977
    %v979 = vpop.f32.mrf.mxu0
    %980 = vmatprep.mubr.f32.mxu0 0.0
    %981 = vmatmul.mubr.f32.gmra.mxu0 %v897
    %v982 = vpop.f32.mrf.mxu0
    %v983 = vadd.f32 %v892, %v982
    %v984 = vpop.f32.mrf.mxu0
    %985 = vmatprep.mubr.f32.mxu0 0.0
    %986 = vmatmul.mubr.f32.gmra.mxu0 %v900
    %v987 = vpop.f32.mrf.mxu0
    %v988 = vadd.f32 %v892, %v987
    %v989 = vpop.f32.mrf.mxu0
    %990 = vmatprep.mubr.f32.mxu0 0.0
    %991 = vmatmul.mubr.f32.gmra.mxu0 %v903
    %v992 = vpop.f32.mrf.mxu0
    %v993 = vadd.f32 %v892, %v992
    %v994 = vpop.f32.mrf.mxu0
    %995 = vmatprep.mubr.f32.mxu0 0.0
    %996 = vmatmul.mubr.f32.gmra.mxu0 %v906
    %v997 = vpop.f32.mrf.mxu0
    %v998 = vadd.f32 %v892, %v997
    %v999 = vpop.f32.mrf.mxu0
    %1000 = vmatprep.mubr.f32.mxu0 0.0
    %1001 = vmatmul.mubr.f32.gmra.mxu0 %v909
    %v1002 = vpop.f32.mrf.mxu0
    %v1003 = vadd.f32 %v892, %v1002
    %v1004 = vpop.f32.mrf.mxu0
    %1005 = vdwg.mxu0
    %v1006 = vld [vmem:[#allocation2 + $0x1f0] sm:$0x1]
    %v1007 = vlaneseq
    %v1008 = vshrl.u32 %v1007, 7
    %v1009 = vsub.s32 0, %v1008
    %v1010 = vrot.slane %v1006, %v1009
    %v1011 = vmul.f32 %v864, %v1010
    %v1012 = vmul.f32 %v867, %v1010
    %v1013 = vmul.f32 %v870, %v1010
    %v1014 = vmul.f32 %v873, %v1010
    %v1015 = vmul.f32 %v876, %v1010
    %v1016 = vmul.f32 %v879, %v1010
    %v1017 = vadd.f32 %v978, %v1011
    %v1018 = vadd.f32 %v983, %v1012
    %v1019 = vadd.f32 %v988, %v1013
    %v1020 = vadd.f32 %v993, %v1014
    %v1021 = vadd.f32 %v998, %v1015
    %v1022 = vadd.f32 %v1003, %v1016
    %vm1023 = vcmask 23552
    %1024 = vst.msk [vmem:[%s2] sm:$0xff] %vm1023, %v1017
    %1025 = vst.msk [vmem:[%s2 + $0x8] sm:$0xff] %vm1023, %v1018
    %1026 = vst.msk [vmem:[%s2 + $0x10] sm:$0xff] %vm1023, %v1019
    %1027 = vst.msk [vmem:[%s2 + $0x18] sm:$0xff] %vm1023, %v1020
    %1028 = vst.msk [vmem:[%s2 + $0x20] sm:$0xff] %vm1023, %v1021
    %1029 = vst.msk [vmem:[%s2 + $0x28] sm:$0xff] %vm1023, %v1022
    %1030 = vst.msk [vmem:[%s3] sm:$0xff] %vm765, %v821
    %1031 = vst.msk [vmem:[%s3 + $0x8] sm:$0xff] %vm765, %v823
    %1032 = vst.msk [vmem:[%s3 + $0x10] sm:$0xff] %vm765, %v825
    %1033 = vst.msk [vmem:[%s3 + $0x18] sm:$0xff] %vm765, %v827
    %1034 = vst.msk [vmem:[%s3 + $0x20] sm:$0xff] %vm765, %v829
    %1035 = vst.msk [vmem:[%s3 + $0x28] sm:$0xff] %vm765, %v831
    %1036 = vst.msk [vmem:[%s4] sm:$0xff] %vm765, %v856
    %1037 = vst.msk [vmem:[%s4 + $0x8] sm:$0xff] %vm765, %v857
    %1038 = vst.msk [vmem:[%s4 + $0x10] sm:$0xff] %vm765, %v858
    %1039 = vst.msk [vmem:[%s4 + $0x18] sm:$0xff] %vm765, %v859
    %1040 = vst.msk [vmem:[%s4 + $0x20] sm:$0xff] %vm765, %v860
    %1041 = vst.msk [vmem:[%s4 + $0x28] sm:$0xff] %vm765, %v861
    // Predicated region
    $region18: #{gbbmr_forward.1} parent=1 // pred_check
      _
    $region19: #{gbbmr_forward.1} parent=1 // pred_check_branch
      %1043 = sbr.rel (0) target = $region21
    $region20: #{gbbmr_forward.1} parent=1 // pred_region
      _
    $region21: #{gbbmr_forward.1} parent=1 // pred_fallthru
      _
    // Predicated region
    $region22: #{gbbmr_forward.1} parent=1 // pred_check
      _
    $region23: #{gbbmr_forward.1} parent=1 // pred_check_branch
      %1045 = sbr.rel (0) target = $region25
    $region24: #{gbbmr_forward.1} parent=1 // pred_region
      _
    $region25: #{gbbmr_forward.1} parent=1 // pred_fallthru
      _
    // Predicated region
    $region26: #{gbbmr_forward.1} parent=1 // pred_check
      _
    $region27: #{gbbmr_forward.1} parent=1 // pred_check_branch
      %1047 = sbr.rel (0) target = $region29
    $region28: #{gbbmr_forward.1} parent=1 // pred_region
      _
    $region29: #{gbbmr_forward.1} parent=1 // pred_fallthru
      _
    // Predicated region
    $region30: #{gbbmr_forward.1} parent=1 // pred_check
      _
    $region31: #{gbbmr_forward.1} parent=1 // pred_check_branch
      %1049 = sbr.rel (0) target = $region33
    $region32: #{gbbmr_forward.1} parent=1 // pred_region
      _
    $region33: #{gbbmr_forward.1} parent=1 // pred_fallthru
      _
    // Predicated region
    $region34: #{gbbmr_forward.1} parent=1 // pred_check
      _
    $region35: #{gbbmr_forward.1} parent=1 // pred_check_branch
      %1051 = sbr.rel (0) target = $region37
    $region36: #{gbbmr_forward.1} parent=1 // pred_region
      _
    $region37: #{gbbmr_forward.1} parent=1 // pred_fallthru
      _
    // Predicated region
    $region38: #{gbbmr_forward.1} parent=1 // pred_check
      _
    $region39: #{gbbmr_forward.1} parent=1 // pred_check_branch
      %1053 = sbr.rel (0) target = $region41
    $region40: #{gbbmr_forward.1} parent=1 // pred_region
      _
    $region41: #{gbbmr_forward.1} parent=1 // pred_fallthru
      _
    %1054 = vsyncpa [#allocation3], 1
    %1055 = vsyncpa [#allocation5], 1

</llo_original>
